<compile_context>
chip_gen: v5e
topology: v5e:2x2
jax: 0.10.0
libtpu: 0.0.40
codegen_flags: <defaults>
</compile_context>

<pallas_src>
import jax
import jax.numpy as jnp
from jax.experimental import pallas as pl
from jax.experimental.pallas import tpu as pltpu


def make_compose_kernel(kinds, alphas):
    """Build a Compose kernel with kinds/alphas baked in as static config.

    kinds  : Python sequence of ints, 0 = L1, 1 = L2 (per sub-module)
    alphas : Python sequence of floats (per sub-module scale)
    """
    kinds = tuple(int(k) for k in kinds)
    alphas = tuple(float(a) for a in alphas)
    K = len(kinds)
    assert len(alphas) == K

    def compose_kernel(w_ref, out_ref):
        """Single invocation: reduce all K regularizers at once.

        w_ref   : VMEM ref, shape (K, R, C) — all stacked weights
        out_ref : SMEM ref, shape (1, 1)    — scalar result, written once
        """
        acc = None
        for k in range(K):                       # K small & static -> unroll
            w = w_ref[k].astype(jnp.float32)     # (R, C)
            # Static kind selection: only ONE elementwise op per module.
            term = (w * w) if kinds[k] == 1 else jnp.abs(w)
            contrib = alphas[k] * term           # constant broadcast vmul
            acc = contrib if acc is None else acc + contrib

        # Single cross-lane + cross-sublane reduction; single scalar store to
        # SMEM (scalar path, otherwise idle).
        out_ref[0, 0] = jnp.sum(acc)

    return compose_kernel


def compose_forward(weights, alphas, kinds):
    """weights: (K, R, C) array; alphas/kinds: static Python sequences.

    Returns scalar f32 = sum_k penalty_k  (== Compose.forward()).
    """
    kernel = make_compose_kernel(kinds, alphas)
    out = pl.pallas_call(
        kernel,
        out_shape=jax.ShapeDtypeStruct((1, 1), jnp.float32),
        in_specs=[pl.BlockSpec(memory_space=pltpu.MemorySpace.VMEM)],   # weights
        out_specs=pl.BlockSpec(memory_space=pltpu.MemorySpace.SMEM),    # scalar out
    )(weights)
    return out[0, 0]


def compose_reference(weights, alphas, kinds):
    w = weights.astype(jnp.float32)
    l2 = jnp.sum(w * w, axis=(1, 2))
    l1 = jnp.sum(jnp.abs(w), axis=(1, 2))
    per_mod = alphas * jnp.where(kinds == 1, l2, l1)
    return jnp.sum(per_mod)


if __name__ == "__main__":
    key = jax.random.PRNGKey(0)
    K, R, C = 3, 16, 128            # 3 regularizers, each on a (16, 128) weight
    kw, _ = jax.random.split(key)
    weights = jax.random.normal(kw, (K, R, C), dtype=jnp.float32)

    # Module config (static, as in a real Compose of Regularization modules).
    alphas_cfg = [0.01, 0.1, 0.5]
    kinds_cfg = [0, 1, 1]           # [L1, L2, L2]

    result = jax.block_until_ready(compose_forward(weights, alphas_cfg, kinds_cfg))
    expected = compose_reference(
        weights,
        jnp.array(alphas_cfg, dtype=jnp.float32),
        jnp.array(kinds_cfg, dtype=jnp.int32),
    )

    assert jnp.allclose(result, expected, rtol=1e-5, atol=1e-5), (result, expected)
    print("KERNEL_OK")
</pallas_src>

<mosaic_0001>
module attributes {stable_mosaic.version = 11 : i64} {
  func.func @compose_kernel(%arg0: memref<3x16x128xf32, #tpu.memory_space<vmem>>, %arg1: memref<1x1xf32, #tpu.memory_space<smem>>) attributes {dimension_semantics = [], scalar_prefetch = 0 : i64, scratch_operands = 0 : i64, tpu.core_type = #tpu.core_type<tc>} {
    %c0 = arith.constant 0 : index
    %c0_0 = arith.constant 0 : index
    %c0_1 = arith.constant 0 : index
    %0 = vector.load %arg0[%c0, %c0_0, %c0_1] : memref<3x16x128xf32, #tpu.memory_space<vmem>>, vector<1x16x128xf32>
    %1 = vector.shape_cast %0 : vector<1x16x128xf32> to vector<16x128xf32>
    %2 = math.absf %1 : vector<16x128xf32>
    %cst = arith.constant 0.00999999977 : f32
    %3 = vector.broadcast %cst : f32 to vector<16x128xf32>
    %4 = arith.mulf %3, %2 : vector<16x128xf32>
    %c1 = arith.constant 1 : index
    %c0_2 = arith.constant 0 : index
    %c0_3 = arith.constant 0 : index
    %5 = vector.load %arg0[%c1, %c0_2, %c0_3] : memref<3x16x128xf32, #tpu.memory_space<vmem>>, vector<1x16x128xf32>
    %6 = vector.shape_cast %5 : vector<1x16x128xf32> to vector<16x128xf32>
    %7 = arith.mulf %6, %6 : vector<16x128xf32>
    %cst_4 = arith.constant 1.000000e-01 : f32
    %8 = vector.broadcast %cst_4 : f32 to vector<16x128xf32>
    %9 = arith.mulf %8, %7 : vector<16x128xf32>
    %10 = arith.addf %4, %9 : vector<16x128xf32>
    %c2 = arith.constant 2 : index
    %c0_5 = arith.constant 0 : index
    %c0_6 = arith.constant 0 : index
    %11 = vector.load %arg0[%c2, %c0_5, %c0_6] : memref<3x16x128xf32, #tpu.memory_space<vmem>>, vector<1x16x128xf32>
    %12 = vector.shape_cast %11 : vector<1x16x128xf32> to vector<16x128xf32>
    %13 = arith.mulf %12, %12 : vector<16x128xf32>
    %cst_7 = arith.constant 5.000000e-01 : f32
    %14 = vector.broadcast %cst_7 : f32 to vector<16x128xf32>
    %15 = arith.mulf %14, %13 : vector<16x128xf32>
    %16 = arith.addf %10, %15 : vector<16x128xf32>
    %17 = vector.shape_cast %16 : vector<16x128xf32> to vector<1x16x128xf32>
    %cst_8 = arith.constant dense<0.000000e+00> : vector<1xf32>
    %18 = vector.multi_reduction <add>, %17, %cst_8 [1, 2] : vector<1x16x128xf32> to vector<1xf32>
    %19 = vector.shape_cast %18 : vector<1xf32> to vector<1x1x1xf32>
    %20 = vector.extract %19[0, 0, 0] : f32 from vector<1x1x1xf32>
    %c0_9 = arith.constant 0 : index
    %c0_10 = arith.constant 0 : index
    %21 = memref.load %arg1[%c0_9, %c0_10] : memref<1x1xf32, #tpu.memory_space<smem>>
    memref.store %20, %arg1[%c0_9, %c0_10] : memref<1x1xf32, #tpu.memory_space<smem>>
    return
  }
}

</mosaic_0001>

<llo_original>
// kernel: tpu_custom_call.1
$region0: #{tpu_custom_call.1}
  #allocation0 [shape = 'u32[]', space=smem, size = 0x4, offset = 0x4, fixed_abs, tag = 'smem constant byte address 0x4 - core index']
  #allocation1 [shape = 'u32[72,128]{1,0:T(1,128)}', space=vmem, size = 0x9000, scoped, tag = 'internal scratch']
  %s0 = inlined_call_operand.hbm [shape: f32[3,16,128], index: 0, kind: input, shape index: {}]
  %s1 = inlined_call_operand.hbm [shape: f32[1,1], index: 1, kind: output, shape index: {}]
  %s2 = sld [smem:[#allocation0]]
  $region18: #{tpu_custom_call.1} parent=0
    _
  %s4 = ssub.s32 1, %s2
  %s5 = scalar_select 0, %s4, %s2
  $region1: #{tpu_custom_call.1} parent=0
    #allocation2 [shape = 'u8[24576]{0}', space=vmem, size = 0x6000, scoped, tag = 'input window, operand 0, single buffered']
    #allocation3 [shape = 's32[1]{0}', space=sflag, size = 0x4, scoped, tag = 'scoped memory for tpu_custom_call.1']
    #allocation4 [shape = 's32[1]{0}', space=sflag, size = 0x4, scoped, tag = 'scoped memory for tpu_custom_call.1']
    #allocation5 [shape = 'u8[512]{0}', space=smem, size = 0x200, scoped, tag = 'output window, operand 0, single buffered']
    %6 = vsyncpa [#allocation3], 0
    %7 = vsyncpa [#allocation4], 0
    // Predicated region
    $region2: #{tpu_custom_call.1} parent=1 // pred_check
      _
    $region3: #{tpu_custom_call.1} parent=1 // pred_check_branch
      %9 = sbr.rel (0) target = $region5
    $region4: #{tpu_custom_call.1} parent=1 // pred_region
      %11 = vsyncadd [#allocation3], 0
      %s12 = sshll.u32 %s0, 4
      %s13 = int_to_ptr.hbm [resolvable:$true] %s12
      %s14 = sshll.u32 [#allocation2], 4
      %s15 = int_to_ptr.vmem [resolvable:$true] %s14
      %20 = dma.hbm_to_vmem [thread:$0]  %s13, 768, %s15, [#allocation3], 128, 128, 8
    $region5: #{tpu_custom_call.1} parent=1 // pred_fallthru
      _
    // Predicated region
    $region6: #{tpu_custom_call.1} parent=1 // pred_check
      _
    $region7: #{tpu_custom_call.1} parent=1 // pred_check_branch
      %22 = sbr.rel (0) target = $region9
    $region8: #{tpu_custom_call.1} parent=1 // pred_region
      %24 = dma.done [#allocation3], 768
    $region9: #{tpu_custom_call.1} parent=1 // pred_fallthru
      _
    %v25 = vld [vmem:[#allocation2] sm:$0xff]
    %v26 = vld [vmem:[#allocation2 + $0x8] sm:$0xff]
    %v27 = vand.u32 2147483647, %v25
    %v28 = vand.u32 2147483647, %v26
    %v29 = vmul.f32 %v27, 0.01
    %v30 = vmul.f32 %v28, 0.01
    %s31 = scalar_lea.vmem [#allocation2], 16
    %v32 = vld [vmem:[%s31] sm:$0xff]
    %v33 = vld [vmem:[%s31 + $0x8] sm:$0xff]
    %v34 = vmul.f32 %v32, %v32
    %v35 = vmul.f32 %v33, %v33
    %v36 = vmul.f32 %v34, 0.1
    %v37 = vmul.f32 %v35, 0.1
    %v38 = vadd.f32 %v29, %v36
    %v39 = vadd.f32 %v30, %v37
    %s40 = scalar_lea.vmem [#allocation2], 32
    %v41 = vld [vmem:[%s40] sm:$0xff]
    %v42 = vld [vmem:[%s40 + $0x8] sm:$0xff]
    %v43 = vmul.f32 %v41, %v41
    %v44 = vmul.f32 %v42, %v42
    %v45 = vmul.f32 %v43, 0.5
    %v46 = vmul.f32 %v44, 0.5
    %v47 = vadd.f32 %v38, %v45
    %v48 = vadd.f32 %v39, %v46
    %v49 = vadd.f32 %v47, %v48
    %50 = vadd.xlane.f32.xlu0 %v49
    %v51 = vpop.xlane.xlu0 %50
    %v52 = vrot.slane %v51, 4
    %v53 = vadd.f32 %v51, %v52
    %v54 = vrot.slane %v53, 2
    %v55 = vadd.f32 %v53, %v54
    %v56 = vrot.slane %v55, 1
    %v57 = vadd.f32 %v55, %v56
    %s58 = vtos %v57
    %s59 = scalar_lea.smem [#allocation5], 0
    %60 = sst [smem:[%s59]] %s58
    // Predicated region
    $region10: #{tpu_custom_call.1} parent=1 // pred_check
      _
    $region11: #{tpu_custom_call.1} parent=1 // pred_check_branch
      %62 = sbr.rel (0) target = $region13
    $region12: #{tpu_custom_call.1} parent=1 // pred_region
      %64 = vsyncadd [#allocation4], 0
      %s66 = sshll.u32 %s1, 4
      %s67 = int_to_ptr.hbm [resolvable:$true] %s66
      %69 = dma.smem_to_hbm [#allocation5], 16, %s67, [#allocation4]
    $region13: #{tpu_custom_call.1} parent=1 // pred_fallthru
      _
    // Predicated region
    $region14: #{tpu_custom_call.1} parent=1 // pred_check
      _
    $region15: #{tpu_custom_call.1} parent=1 // pred_check_branch
      %71 = sbr.rel (0) target = $region17
    $region16: #{tpu_custom_call.1} parent=1 // pred_region
      %73 = dma.done [#allocation4], 16
    $region17: #{tpu_custom_call.1} parent=1 // pred_fallthru
      _
    %74 = sfence
    %75 = vsyncpa [#allocation3], 1
    %76 = vsyncpa [#allocation4], 1

</llo_original>
